<compile_context>
chip_gen: v7x
topology: tpu7x:2x2x1
jax: 0.10.0
libtpu: 0.0.40
codegen_flags: <defaults>
</compile_context>

<pallas_src>
import functools

import jax
import jax.numpy as jnp
from jax.experimental import pallas as pl
from jax.experimental.pallas import tpu as pltpu

_EPS = 1e-5


def _cdiv(a, b):
    return (a + b - 1) // b


def _round_up(a, b):
    return _cdiv(a, b) * b


def _actor_kernel(x_ref, w0_ref, w1_ref, w2e_ref, w3_ref, small_ref, out_ref,
                  *, hidden, feat, n_act, n_pad, in_dim):
    # x = [obs | lambda] packed as one operand; last column is lambda.
    x = x_ref[...]                              # (Bt, obs_dim + 1), f32
    lam = x[:, in_dim - 1:in_dim]               # (Bt, 1) static lane slice

    # packed small params: rows = [b0, b1, b2, b3 (pads = -1e30), w2l]
    b0 = small_ref[0:1, :hidden]
    b1 = small_ref[1:2, :feat]
    b2 = small_ref[2:3, :feat]
    b3 = small_ref[3:4, :n_pad]                 # (1, n_pad)
    w2l = small_ref[4:5, :feat]                 # (1, feat)

    # ---- network (2-layer ReLU MLP feature extractor) ----
    # w0 has an extra zero row for the lambda column, so lambda doesn't leak in.
    h0 = jnp.maximum(
        jnp.dot(x, w0_ref[...], preferred_element_type=jnp.float32) + b0, 0.0)
    embed = jnp.maximum(
        jnp.dot(h0, w1_ref[...], preferred_element_type=jnp.float32) + b1, 0.0)

    # ---- branch1: Linear(cat([embed, lambda_])) -> ReLU -> Linear ----
    # concat handled as a split matmul; the K=1 lambda term is a VPU broadcast
    # multiply (no MXU push/pop for a single-MAC contraction).
    h = (jnp.dot(embed, w2e_ref[...], preferred_element_type=jnp.float32)
         + lam * w2l + b2)
    h = jnp.maximum(h, 0.0)
    logits = jnp.dot(h, w3_ref[...], preferred_element_type=jnp.float32) + b3

    # ---- softmax + eps + renormalize, fused: one reduce, one multiply ----
    #   renorm(softmax(x)+eps) == (e + eps*S) / (S*(1 + n_act*eps)),  S = sum(e)
    # pad lanes carry bias -1e30 -> exp underflows to exactly 0 in f32.
    m = jnp.max(logits, axis=-1, keepdims=True)
    e = jnp.exp(logits - m)
    s = jnp.sum(e, axis=-1, keepdims=True)
    d = s * (1.0 + n_act * _EPS)
    r = pl.reciprocal(d, approx=True)           # EUP slot (otherwise idle)
    r = r * (2.0 - d * r)                       # one Newton step -> ~f32 accuracy
    out_ref[...] = ((e + _EPS * s) * r).astype(out_ref.dtype)


def categorical_actor_forward(obs, lambda_, params, *,
                              tile_b_max=1024, gridless_max=256):
    """Fused CategoricalActor forward. Returns (B, n_actions) probabilities."""
    B, obs_dim = obs.shape
    in_dim = obs_dim + 1
    # Fold lambda into obs as one trailing column (removes a 1-lane operand).
    x = jnp.concatenate([obs, lambda_.astype(obs.dtype)], axis=1)

    w0 = params["w0_aug"]            # (obs_dim + 1, hidden), last row = 0
    w1, w2e = params["w1"], params["w2e"]
    w3p, small = params["w3_pad"], params["small"]
    hidden, feat = w0.shape[1], w1.shape[1]
    n_act = params["n_act"]
    n_pad = w3p.shape[1]

    kernel = functools.partial(_actor_kernel, hidden=hidden, feat=feat,
                               n_act=n_act, n_pad=n_pad, in_dim=in_dim)
    weights = (w0, w1, w2e, w3p, small)

    if B <= gridless_max:
        # Small batch: single invocation, no grid (no per-step pipeline
        # bookkeeping), all 6 operands resident in VMEM.
        out = pl.pallas_call(
            kernel,
            out_shape=jax.ShapeDtypeStruct((B, n_pad), jnp.float32),
            in_specs=[pl.BlockSpec(memory_space=pltpu.MemorySpace.VMEM)] * 6,
            out_specs=pl.BlockSpec(memory_space=pltpu.MemorySpace.VMEM),
        )(x, *weights)
    else:
        # Large batch: tile over batch with the largest tile that keeps >= 2
        # tiles (so both v7x TCs run); even tile count for balance (harmless on
        # single-TC v5e/v6e). Weights stay VMEM-resident via constant index_maps.
        tile_b = min(tile_b_max, _round_up(_cdiv(B, 2), 8))
        n_tiles = _cdiv(B, tile_b)
        if n_tiles % 2:
            n_tiles += 1
        Bp = n_tiles * tile_b
        if Bp != B:
            x = jnp.pad(x, ((0, Bp - B), (0, 0)))
        const = lambda i: (0, 0)
        out = pl.pallas_call(
            kernel,
            out_shape=jax.ShapeDtypeStruct((Bp, n_pad), jnp.float32),
            grid=(n_tiles,),
            in_specs=[
                pl.BlockSpec((tile_b, in_dim), lambda i: (i, 0)),
                pl.BlockSpec(w0.shape, const),
                pl.BlockSpec(w1.shape, const),
                pl.BlockSpec(w2e.shape, const),
                pl.BlockSpec(w3p.shape, const),
                pl.BlockSpec(small.shape, const),
            ],
            out_specs=pl.BlockSpec((tile_b, n_pad), lambda i: (i, 0)),
            compiler_params=pltpu.CompilerParams(
                dimension_semantics=("parallel",)),
        )(x, *weights)
    # Single combined slice (one XLA op) dropping batch padding + pad lanes.
    return out[:B, :n_act]


def init_params(key, obs_dim, hidden, feat, n_actions):
    """Deterministic parameter init (uniform fan-in, like PyTorch defaults)."""
    ks = jax.random.split(key, 4)

    def lin(k, fan_in, fan_out):
        bound = 1.0 / (float(fan_in) ** 0.5)
        kw, kb = jax.random.split(k)
        w = jax.random.uniform(kw, (fan_in, fan_out), jnp.float32, -bound, bound)
        b = jax.random.uniform(kb, (1, fan_out), jnp.float32, -bound, bound)
        return w, b

    # network MLP: obs_dim -> hidden -> feat
    w0, b0 = lin(ks[0], obs_dim, hidden)
    w1, b1 = lin(ks[1], hidden, feat)
    # branch1 first linear: (feat + 1) -> feat ; split into embed part + lambda row
    w2_full, b2 = lin(ks[2], feat + 1, feat)
    w2e, w2l = w2_full[:feat, :], w2_full[feat:, :]          # (feat,feat), (1,feat)
    # branch1 second linear: feat -> n_actions
    w3, b3 = lin(ks[3], feat, n_actions)

    # lambda folded into obs: extra ZERO input row so it never touches h0.
    w0_aug = jnp.concatenate([w0, jnp.zeros((1, hidden), jnp.float32)], axis=0)

    # Output / logits lane width: only depends on n_actions (kept >= 128 so the
    # final store is lane-dense / unmasked).
    n_pad = _round_up(n_actions, 128)
    # Width of the packed bias operand (DMA'd once; does not touch the output).
    small_w = _round_up(max(hidden, feat, n_pad), 128)

    # zero weight columns, -1e30 bias on pad lanes -> exp() == 0 exactly (f32)
    w3_pad = jnp.zeros((feat, n_pad), jnp.float32).at[:, :n_actions].set(w3)

    def row(v):
        v = v.reshape(-1)
        return jnp.zeros((small_w,), jnp.float32).at[:v.shape[0]].set(v)

    b3_row = jnp.full((small_w,), -1e30, jnp.float32).at[:n_actions].set(b3[0])
    # single packed operand: one DMA instead of five
    small = jnp.stack([row(b0), row(b1), row(b2), b3_row, row(w2l)], axis=0)

    return dict(
        # kernel operands
        w0_aug=w0_aug, w1=w1, w2e=w2e, w3_pad=w3_pad, small=small, n_act=n_actions,
        # raw params kept for the pure-JAX reference
        w0=w0, b0=b0, b1=b1, b2=b2, w2l=w2l, w3=w3, b3=b3)


def reference_forward(obs, lambda_, p):
    """Pure-JAX reference (mirrors the PyTorch forward), full f32 precision."""
    hp = jax.lax.Precision.HIGHEST
    h0 = jnp.maximum(jnp.dot(obs, p["w0"], precision=hp) + p["b0"], 0.0)
    embed = jnp.maximum(jnp.dot(h0, p["w1"], precision=hp) + p["b1"], 0.0)
    cat = jnp.concatenate([embed, lambda_], axis=1)
    w2_full = jnp.concatenate([p["w2e"], p["w2l"]], axis=0)
    h = jnp.maximum(jnp.dot(cat, w2_full, precision=hp) + p["b2"], 0.0)
    logits = jnp.dot(h, p["w3"], precision=hp) + p["b3"]
    prob = jax.nn.softmax(logits, axis=-1) + _EPS
    return prob / jnp.sum(prob, axis=-1, keepdims=True)


if __name__ == "__main__":
    B, OBS_DIM, HIDDEN, FEAT, N_ACT = 8, 16, 32, 32, 5

    key = jax.random.PRNGKey(0)
    k_par, k_obs, k_lam, k_obs2, k_lam2 = jax.random.split(key, 5)

    params = init_params(k_par, OBS_DIM, HIDDEN, FEAT, N_ACT)

    # --- small-batch (grid-less) path ---
    obs = jax.random.normal(k_obs, (B, OBS_DIM), jnp.float32)
    lam = jax.random.uniform(k_lam, (B, 1), jnp.float32)

    prob = jax.block_until_ready(categorical_actor_forward(obs, lam, params))
    ref = reference_forward(obs, lam, params)
    assert prob.shape == (B, N_ACT)
    assert bool(jnp.all(jnp.isfinite(prob)))
    assert jnp.allclose(prob, ref, atol=1e-4, rtol=1e-4), "mismatch vs reference (small B)"
    assert jnp.allclose(jnp.sum(prob, axis=-1), 1.0, atol=1e-5)

    # --- batch-tiled path (grid over batch, >=2 tiles, weights VMEM-resident) ---
    B2 = 600                                      # non-multiple of tile -> exercises padding
    obs2 = jax.random.normal(k_obs2, (B2, OBS_DIM), jnp.float32)
    lam2 = jax.random.uniform(k_lam2, (B2, 1), jnp.float32)

    prob2 = jax.block_until_ready(categorical_actor_forward(obs2, lam2, params))
    ref2 = reference_forward(obs2, lam2, params)
    assert prob2.shape == (B2, N_ACT)
    assert jnp.allclose(prob2, ref2, atol=1e-4, rtol=1e-4), "mismatch vs reference (large B)"
    assert jnp.allclose(jnp.sum(prob2, axis=-1), 1.0, atol=1e-5)

    print("KERNEL_OK")
</pallas_src>

<mosaic_0001>
module attributes {stable_mosaic.version = 11 : i64} {
  func.func @_actor_kernel(%arg0: memref<8x17xf32, #tpu.memory_space<vmem>>, %arg1: memref<17x32xf32, #tpu.memory_space<vmem>>, %arg2: memref<32x32xf32, #tpu.memory_space<vmem>>, %arg3: memref<32x32xf32, #tpu.memory_space<vmem>>, %arg4: memref<32x128xf32, #tpu.memory_space<vmem>>, %arg5: memref<5x128xf32, #tpu.memory_space<vmem>>, %arg6: memref<8x128xf32, #tpu.memory_space<vmem>>) attributes {dimension_semantics = [], scalar_prefetch = 0 : i64, scratch_operands = 0 : i64, tpu.core_type = #tpu.core_type<tc>} {
    %c0 = arith.constant 0 : index
    %c0_0 = arith.constant 0 : index
    %0 = vector.load %arg0[%c0, %c0_0] : memref<8x17xf32, #tpu.memory_space<vmem>>, vector<8x17xf32>
    %1 = vector.extract_strided_slice %0 {offsets = [0, 16], sizes = [8, 1], strides = [1, 1]} : vector<8x17xf32> to vector<8x1xf32>
    %c0_1 = arith.constant 0 : index
    %c0_2 = arith.constant 0 : index
    %2 = vector.load %arg5[%c0_1, %c0_2] : memref<5x128xf32, #tpu.memory_space<vmem>>, vector<1x32xf32>
    %c1 = arith.constant 1 : index
    %c0_3 = arith.constant 0 : index
    %3 = vector.load %arg5[%c1, %c0_3] : memref<5x128xf32, #tpu.memory_space<vmem>>, vector<1x32xf32>
    %c2 = arith.constant 2 : index
    %c0_4 = arith.constant 0 : index
    %4 = vector.load %arg5[%c2, %c0_4] : memref<5x128xf32, #tpu.memory_space<vmem>>, vector<1x32xf32>
    %c3 = arith.constant 3 : index
    %c0_5 = arith.constant 0 : index
    %5 = vector.load %arg5[%c3, %c0_5] : memref<5x128xf32, #tpu.memory_space<vmem>>, vector<1x128xf32>
    %c4 = arith.constant 4 : index
    %c0_6 = arith.constant 0 : index
    %6 = vector.load %arg5[%c4, %c0_6] : memref<5x128xf32, #tpu.memory_space<vmem>>, vector<1x32xf32>
    %c0_7 = arith.constant 0 : index
    %c0_8 = arith.constant 0 : index
    %7 = vector.load %arg1[%c0_7, %c0_8] : memref<17x32xf32, #tpu.memory_space<vmem>>, vector<17x32xf32>
    %cst = arith.constant dense<0.000000e+00> : vector<8x32xf32>
    %8 = tpu.matmul %0, %7, %cst {dimension_numbers = #tpu.dot_dimension_numbers<[1], [0], [0], [1], [0, 0, 1, 1], [], []>} : vector<8x17xf32>, vector<17x32xf32>, vector<8x32xf32> -> vector<8x32xf32>
    %9 = vector.broadcast %2 : vector<1x32xf32> to vector<8x32xf32>
    %10 = arith.addf %8, %9 : vector<8x32xf32>
    %cst_9 = arith.constant 0.000000e+00 : f32
    %11 = vector.broadcast %cst_9 : f32 to vector<8x32xf32>
    %12 = arith.maximumf %10, %11 : vector<8x32xf32>
    %c0_10 = arith.constant 0 : index
    %c0_11 = arith.constant 0 : index
    %13 = vector.load %arg2[%c0_10, %c0_11] : memref<32x32xf32, #tpu.memory_space<vmem>>, vector<32x32xf32>
    %cst_12 = arith.constant dense<0.000000e+00> : vector<8x32xf32>
    %14 = tpu.matmul %12, %13, %cst_12 {dimension_numbers = #tpu.dot_dimension_numbers<[1], [0], [0], [1], [0, 0, 1, 1], [], []>} : vector<8x32xf32>, vector<32x32xf32>, vector<8x32xf32> -> vector<8x32xf32>
    %15 = vector.broadcast %3 : vector<1x32xf32> to vector<8x32xf32>
    %16 = arith.addf %14, %15 : vector<8x32xf32>
    %cst_13 = arith.constant 0.000000e+00 : f32
    %17 = vector.broadcast %cst_13 : f32 to vector<8x32xf32>
    %18 = arith.maximumf %16, %17 : vector<8x32xf32>
    %c0_14 = arith.constant 0 : index
    %c0_15 = arith.constant 0 : index
    %19 = vector.load %arg3[%c0_14, %c0_15] : memref<32x32xf32, #tpu.memory_space<vmem>>, vector<32x32xf32>
    %cst_16 = arith.constant dense<0.000000e+00> : vector<8x32xf32>
    %20 = tpu.matmul %18, %19, %cst_16 {dimension_numbers = #tpu.dot_dimension_numbers<[1], [0], [0], [1], [0, 0, 1, 1], [], []>} : vector<8x32xf32>, vector<32x32xf32>, vector<8x32xf32> -> vector<8x32xf32>
    %21 = vector.broadcast %1 : vector<8x1xf32> to vector<8x32xf32>
    %22 = vector.broadcast %6 : vector<1x32xf32> to vector<8x32xf32>
    %23 = arith.mulf %21, %22 : vector<8x32xf32>
    %24 = arith.addf %20, %23 : vector<8x32xf32>
    %25 = vector.broadcast %4 : vector<1x32xf32> to vector<8x32xf32>
    %26 = arith.addf %24, %25 : vector<8x32xf32>
    %cst_17 = arith.constant 0.000000e+00 : f32
    %27 = vector.broadcast %cst_17 : f32 to vector<8x32xf32>
    %28 = arith.maximumf %26, %27 : vector<8x32xf32>
    %c0_18 = arith.constant 0 : index
    %c0_19 = arith.constant 0 : index
    %29 = vector.load %arg4[%c0_18, %c0_19] : memref<32x128xf32, #tpu.memory_space<vmem>>, vector<32x128xf32>
    %cst_20 = arith.constant dense<0.000000e+00> : vector<8x128xf32>
    %30 = tpu.matmul %28, %29, %cst_20 {dimension_numbers = #tpu.dot_dimension_numbers<[1], [0], [0], [1], [0, 0, 1, 1], [], []>} : vector<8x32xf32>, vector<32x128xf32>, vector<8x128xf32> -> vector<8x128xf32>
    %31 = vector.broadcast %5 : vector<1x128xf32> to vector<8x128xf32>
    %32 = arith.addf %30, %31 : vector<8x128xf32>
    %cst_21 = arith.constant dense<0xFF800000> : vector<8xf32>
    %33 = vector.multi_reduction <maximumf>, %32, %cst_21 [1] : vector<8x128xf32> to vector<8xf32>
    %34 = vector.shape_cast %33 : vector<8xf32> to vector<8x1xf32>
    %35 = vector.broadcast %34 : vector<8x1xf32> to vector<8x128xf32>
    %36 = arith.subf %32, %35 : vector<8x128xf32>
    %37 = math.exp %36 : vector<8x128xf32>
    %cst_22 = arith.constant dense<0.000000e+00> : vector<8xf32>
    %38 = vector.multi_reduction <add>, %37, %cst_22 [1] : vector<8x128xf32> to vector<8xf32>
    %39 = vector.shape_cast %38 : vector<8xf32> to vector<8x1xf32>
    %cst_23 = arith.constant 1.000050e+00 : f32
    %40 = vector.broadcast %cst_23 : f32 to vector<8x1xf32>
    %41 = arith.mulf %39, %40 : vector<8x1xf32>
    %42 = tpu.reciprocal %41 {approx = true} : vector<8x1xf32> -> vector<8x1xf32>
    %43 = arith.mulf %41, %42 : vector<8x1xf32>
    %cst_24 = arith.constant 2.000000e+00 : f32
    %44 = vector.broadcast %cst_24 : f32 to vector<8x1xf32>
    %45 = arith.subf %44, %43 : vector<8x1xf32>
    %46 = arith.mulf %42, %45 : vector<8x1xf32>
    %cst_25 = arith.constant 9.99999974E-6 : f32
    %47 = vector.broadcast %cst_25 : f32 to vector<8x1xf32>
    %48 = arith.mulf %47, %39 : vector<8x1xf32>
    %49 = vector.broadcast %48 : vector<8x1xf32> to vector<8x128xf32>
    %50 = arith.addf %37, %49 : vector<8x128xf32>
    %51 = vector.broadcast %46 : vector<8x1xf32> to vector<8x128xf32>
    %52 = arith.mulf %50, %51 : vector<8x128xf32>
    %c0_26 = arith.constant 0 : index
    %c0_27 = arith.constant 0 : index
    %53 = vector.load %arg6[%c0_26, %c0_27] : memref<8x128xf32, #tpu.memory_space<vmem>>, vector<8x128xf32>
    tpu.vector_store %arg6[%c0_26, %c0_27], %52 {strides = array<i32>} : memref<8x128xf32, #tpu.memory_space<vmem>>, vector<8x128xf32>,
    return
  }
}

</mosaic_0001>

<llo_original>
// kernel: tpu_custom_call.1
$region0: #{tpu_custom_call.1}
  #allocation0 [shape = 'u32[]', space=smem, size = 0x4, offset = 0x4, fixed_abs, tag = 'smem constant byte address 0x4 - core index']
  #allocation1 [shape = 'u32[144,128]{1,0:T(1,128)}', space=vmem, size = 0x12000, scoped, tag = 'internal scratch']
  %s0 = inlined_call_operand.hbm [shape: f32[8,17], index: 0, kind: input, shape index: {}]
  %s1 = inlined_call_operand.hbm [shape: f32[17,32], index: 1, kind: input, shape index: {}]
  %s2 = inlined_call_operand.hbm [shape: f32[32,32], index: 2, kind: input, shape index: {}]
  %s3 = inlined_call_operand.hbm [shape: f32[32,32], index: 3, kind: input, shape index: {}]
  %s4 = inlined_call_operand.hbm [shape: f32[32,128], index: 4, kind: input, shape index: {}]
  %s5 = inlined_call_operand.vmem [shape: f32[5,128], index: 5, kind: input, shape index: {}]
  %s6 = inlined_call_operand.hbm [shape: f32[8,128], index: 6, kind: output, shape index: {}]
  %s7 = sld [smem:[#allocation0]]
  $region54: #{tpu_custom_call.1} parent=0
    _
  %s9 = ssub.s32 1, %s7
  %s10 = scalar_select 0, %s9, %s7
  $region1: #{tpu_custom_call.1} parent=0
    #allocation2 [shape = 'u8[4096]{0}', space=vmem, size = 0x1000, scoped, tag = 'input window, operand 0, single buffered']
    #allocation3 [shape = 's32[1]{0}', space=sflag, size = 0x4, scoped, tag = 'scoped memory for tpu_custom_call.1']
    #allocation4 [shape = 's32[1]{0}', space=sflag, size = 0x4, scoped, tag = 'scoped memory for tpu_custom_call.1']
    #allocation5 [shape = 'u8[12288]{0}', space=vmem, size = 0x3000, scoped, tag = 'input window, operand 1, single buffered']
    #allocation6 [shape = 's32[1]{0}', space=sflag, size = 0x4, scoped, tag = 'scoped memory for tpu_custom_call.1']
    #allocation7 [shape = 'u8[16384]{0}', space=vmem, size = 0x4000, scoped, tag = 'input window, operand 2, single buffered']
    #allocation8 [shape = 'u8[16384]{0}', space=vmem, size = 0x4000, scoped, tag = 'input window, operand 3, single buffered']
    #allocation9 [shape = 's32[1]{0}', space=sflag, size = 0x4, scoped, tag = 'scoped memory for tpu_custom_call.1']
    #allocation10 [shape = 'u8[16384]{0}', space=vmem, size = 0x4000, scoped, tag = 'input window, operand 4, single buffered']
    #allocation11 [shape = 'u8[4096]{0}', space=vmem, size = 0x1000, scoped, tag = 'output window, operand 0, single buffered']
    %11 = vsyncpa [#allocation3], 0
    %12 = vsyncpa [#allocation6], 0
    %13 = vsyncpa [#allocation9], 0
    %14 = vsyncpa [#allocation4], 0
    // Predicated region
    $region2: #{tpu_custom_call.1} parent=1 // pred_check
      _
    $region3: #{tpu_custom_call.1} parent=1 // pred_check_branch
      %16 = sbr.rel (0) target = $region5
    $region4: #{tpu_custom_call.1} parent=1 // pred_region
      %s18 = ssub.s32 128, 128
      %19 = vsyncadd [#allocation3], %s18
      %s21 = sshll.u32 [#allocation2], 4
      %s22 = int_to_ptr.vmem [resolvable:$true] %s21
      %24 = dma.hbm_to_vmem [thread:$0]  %s0, 128, %s22, [#allocation3]
    $region5: #{tpu_custom_call.1} parent=1 // pred_fallthru
      _
    // Predicated region
    $region6: #{tpu_custom_call.1} parent=1 // pred_check
      _
    $region7: #{tpu_custom_call.1} parent=1 // pred_check_branch
      %26 = sbr.rel (0) target = $region9
    $region8: #{tpu_custom_call.1} parent=1 // pred_region
      %s28 = ssub.s32 384, 384
      %29 = vsyncadd [#allocation6], %s28
      %s30 = sshll.u32 [#allocation5], 4
      %s31 = int_to_ptr.vmem [resolvable:$true] %s30
      %36 = dma.hbm_to_vmem [thread:$0]  %s1, 384, %s31, [#allocation6], 128, 128, 8
    $region9: #{tpu_custom_call.1} parent=1 // pred_fallthru
      _
    // Predicated region
    $region10: #{tpu_custom_call.1} parent=1 // pred_check
      _
    $region11: #{tpu_custom_call.1} parent=1 // pred_check_branch
      %38 = sbr.rel (0) target = $region13
    $region12: #{tpu_custom_call.1} parent=1 // pred_region
      %s40 = ssub.s32 512, 512
      %41 = vsyncadd [#allocation6], %s40
      %s42 = sshll.u32 [#allocation7], 4
      %s43 = int_to_ptr.vmem [resolvable:$true] %s42
      %48 = dma.hbm_to_vmem [thread:$0]  %s2, 512, %s43, [#allocation6], 128, 128, 8
    $region13: #{tpu_custom_call.1} parent=1 // pred_fallthru
      _
    // Predicated region
    $region14: #{tpu_custom_call.1} parent=1 // pred_check
      _
    $region15: #{tpu_custom_call.1} parent=1 // pred_check_branch
      %50 = sbr.rel (0) target = $region17
    $region16: #{tpu_custom_call.1} parent=1 // pred_region
      %s52 = ssub.s32 512, 512
      %53 = vsyncadd [#allocation9], %s52
      %s54 = sshll.u32 [#allocation8], 4
      %s55 = int_to_ptr.vmem [resolvable:$true] %s54
      %60 = dma.hbm_to_vmem [thread:$0]  %s3, 512, %s55, [#allocation9], 128, 128, 8
    $region17: #{tpu_custom_call.1} parent=1 // pred_fallthru
      _
    // Predicated region
    $region18: #{tpu_custom_call.1} parent=1 // pred_check
      _
    $region19: #{tpu_custom_call.1} parent=1 // pred_check_branch
      %62 = sbr.rel (0) target = $region21
    $region20: #{tpu_custom_call.1} parent=1 // pred_region
      %s64 = ssub.s32 512, 512
      %65 = vsyncadd [#allocation9], %s64
      %s66 = sshll.u32 [#allocation10], 4
      %s67 = int_to_ptr.vmem [resolvable:$true] %s66
      %72 = dma.hbm_to_vmem [thread:$0]  %s4, 512, %s67, [#allocation9], 128, 128, 8
    $region21: #{tpu_custom_call.1} parent=1 // pred_fallthru
      _
    // Predicated region
    $region22: #{tpu_custom_call.1} parent=1 // pred_check
      _
    $region23: #{tpu_custom_call.1} parent=1 // pred_check_branch
      %74 = sbr.rel (0) target = $region25
    $region24: #{tpu_custom_call.1} parent=1 // pred_region
      _
    $region25: #{tpu_custom_call.1} parent=1 // pred_fallthru
      _
    // Predicated region
    $region26: #{tpu_custom_call.1} parent=1 // pred_check
      _
    $region27: #{tpu_custom_call.1} parent=1 // pred_check_branch
      %76 = sbr.rel (0) target = $region29
    $region28: #{tpu_custom_call.1} parent=1 // pred_region
      %77 = dma.done [#allocation3], 128
    $region29: #{tpu_custom_call.1} parent=1 // pred_fallthru
      _
    // Predicated region
    $region30: #{tpu_custom_call.1} parent=1 // pred_check
      _
    $region31: #{tpu_custom_call.1} parent=1 // pred_check_branch
      %79 = sbr.rel (0) target = $region33
    $region32: #{tpu_custom_call.1} parent=1 // pred_region
      %80 = dma.done [#allocation6], 384
    $region33: #{tpu_custom_call.1} parent=1 // pred_fallthru
      _
    // Predicated region
    $region34: #{tpu_custom_call.1} parent=1 // pred_check
      _
    $region35: #{tpu_custom_call.1} parent=1 // pred_check_branch
      %82 = sbr.rel (0) target = $region37
    $region36: #{tpu_custom_call.1} parent=1 // pred_region
      %83 = dma.done [#allocation6], 512
    $region37: #{tpu_custom_call.1} parent=1 // pred_fallthru
      _
    // Predicated region
    $region38: #{tpu_custom_call.1} parent=1 // pred_check
      _
    $region39: #{tpu_custom_call.1} parent=1 // pred_check_branch
      %85 = sbr.rel (0) target = $region41
    $region40: #{tpu_custom_call.1} parent=1 // pred_region
      %86 = dma.done [#allocation9], 512
    $region41: #{tpu_custom_call.1} parent=1 // pred_fallthru
      _
    // Predicated region
    $region42: #{tpu_custom_call.1} parent=1 // pred_check
      _
    $region43: #{tpu_custom_call.1} parent=1 // pred_check_branch
      %88 = sbr.rel (0) target = $region45
    $region44: #{tpu_custom_call.1} parent=1 // pred_region
      %89 = dma.done [#allocation9], 512
    $region45: #{tpu_custom_call.1} parent=1 // pred_fallthru
      _
    %v90 = vld [vmem:[#allocation2] sm:$0xff]
    %v91 = vld [vmem:[%s5] sm:$0x1]
    %v92 = vld [vmem:[%s5 + $0x1] sm:$0x1]
    %v93 = vld [vmem:[%s5 + $0x2] sm:$0x1]
    %v94 = vld [vmem:[%s5 + $0x3] sm:$0x1]
    %v95 = vld [vmem:[%s5 + $0x4] sm:$0x1]
    %v96 = vld [vmem:[#allocation5] sm:$0xff]
    %v97 = vld [vmem:[#allocation5 + $0x8] sm:$0xff]
    %v98 = vld [vmem:[#allocation5 + $0x10] sm:$0x1]
    %v99 = vlaneseq
    %v100 = vshrl.u32 %v99, 7
    %v101 = vsub.s32 0, %v100
    %v102 = vrot.slane %v91, %v101
    %vm103 = vcmask 138240
    %v105 = vsel %vm103, %v90, 0
    %vm107 = vcmask 1040384
    %v109 = vsel %vm107, %v98, 0
    %111 = vmatprep.subr.mxu0 0.0
    %112 = vmatpush1.msra.mxu0 %v96
    %113 = vmatprep.subr.mxu0 0.0
    %114 = vmatpush1.msra.mxu0 %v97
    %115 = vmatprep.subr.mxu0 0.0
    %116 = vmatpush1.msra.mxu0 %v109
    %117 = vmatprep.subr.mxu0 0.0
    %118 = vmatpush1.msra.mxu0 0.0
    %119 = vmatprep.subr.mxu0 0.0
    %120 = vmatpush1.msra.mxu0 0.0
    %121 = vmatprep.subr.mxu0 0.0
    %122 = vmatpush1.msra.mxu0 0.0
    %123 = vmatprep.subr.mxu0 0.0
    %124 = vmatpush1.msra.mxu0 0.0
    %125 = vmatprep.subr.mxu0 0.0
    %126 = vmatpush1.msra.mxu0 0.0
    %127 = vmatprep.subr.mxu0 0.0
    %128 = vmatpush1.msra.mxu0 0.0
    %129 = vmatprep.subr.mxu0 0.0
    %130 = vmatpush1.msra.mxu0 0.0
    %131 = vmatprep.subr.mxu0 0.0
    %132 = vmatpush1.msra.mxu0 0.0
    %133 = vmatprep.subr.mxu0 0.0
    %134 = vmatpush1.msra.mxu0 0.0
    %135 = vmatprep.subr.mxu0 0.0
    %136 = vmatpush1.msra.mxu0 0.0
    %137 = vmatprep.subr.mxu0 0.0
    %138 = vmatpush1.msra.mxu0 0.0
    %139 = vmatprep.subr.mxu0 0.0
    %140 = vmatpush1.msra.mxu0 0.0
    %141 = vmatprep.subr.mxu0 0.0
    %142 = vmatpush1.msra.mxu0 0.0
    %143 = vmatprep.subr.mxu0 0.0
    %144 = vmatpush1.msra.mxu0 0.0
    %145 = vmatprep.subr.mxu0 0.0
    %146 = vmatpush1.msra.mxu0 0.0
    %147 = vmatprep.subr.mxu0 0.0
    %148 = vmatpush1.msra.mxu0 0.0
    %149 = vmatprep.subr.mxu0 0.0
    %150 = vmatpush1.msra.mxu0 0.0
    %151 = vmatprep.subr.mxu0 0.0
    %152 = vmatpush1.msra.mxu0 0.0
    %153 = vmatprep.subr.mxu0 0.0
    %154 = vmatpush1.msra.mxu0 0.0
    %155 = vmatprep.subr.mxu0 0.0
    %156 = vmatpush1.msra.mxu0 0.0
    %157 = vmatprep.subr.mxu0 0.0
    %158 = vmatpush1.msra.mxu0 0.0
    %159 = vmatprep.subr.mxu0 0.0
    %160 = vmatpush1.msra.mxu0 0.0
    %161 = vmatprep.subr.mxu0 0.0
    %162 = vmatpush1.msra.mxu0 0.0
    %163 = vmatprep.subr.mxu0 0.0
    %164 = vmatpush1.msra.mxu0 0.0
    %165 = vmatprep.subr.mxu0 0.0
    %166 = vmatpush1.msra.mxu0 0.0
    %167 = vmatprep.subr.mxu0 0.0
    %168 = vmatpush1.msra.mxu0 0.0
    %169 = vmatprep.subr.mxu0 0.0
    %170 = vmatpush1.msra.mxu0 0.0
    %171 = vmatprep.subr.mxu0 0.0
    %172 = vmatpush1.msra.mxu0 0.0
    %173 = vmatprep.subr.mxu0 0.0
    %174 = vmatpush1.msra.mxu0 0.0
    %175 = vmatprep.mubr.f32.mxu0 0.0
    %176 = vmatmul.mubr.f32.gmra.mrb[0].mxu0 %v105
    %v177 = vpop.f32.mrb[0].mxu0
    %v178 = vadd.f32 %v102, %v177
    %v179 = vpop.f32.mrb[0].mxu0
    %180 = vdwg.mxu0
    %v181 = vmax.f32 %v178, 0.0
    %v182 = vld [vmem:[#allocation7] sm:$0xff]
    %v183 = vld [vmem:[#allocation7 + $0x8] sm:$0xff]
    %v184 = vld [vmem:[#allocation7 + $0x10] sm:$0xff]
    %v185 = vld [vmem:[#allocation7 + $0x18] sm:$0xff]
    %v186 = vlaneseq
    %v187 = vshrl.u32 %v186, 7
    %v188 = vsub.s32 0, %v187
    %v189 = vrot.slane %v92, %v188
    %vm190 = vcmask 261120
    %v192 = vsel %vm190, %v181, 0
    %194 = vmatprep.subr.mxu0 0.0
    %195 = vmatpush1.msra.mxu0 %v182
    %196 = vmatprep.subr.mxu0 0.0
    %197 = vmatpush1.msra.mxu0 %v183
    %198 = vmatprep.subr.mxu0 0.0
    %199 = vmatpush1.msra.mxu0 %v184
    %200 = vmatprep.subr.mxu0 0.0
    %201 = vmatpush1.msra.mxu0 %v185
    %202 = vmatprep.subr.mxu0 0.0
    %203 = vmatpush1.msra.mxu0 0.0
    %204 = vmatprep.subr.mxu0 0.0
    %205 = vmatpush1.msra.mxu0 0.0
    %206 = vmatprep.subr.mxu0 0.0
    %207 = vmatpush1.msra.mxu0 0.0
    %208 = vmatprep.subr.mxu0 0.0
    %209 = vmatpush1.msra.mxu0 0.0
    %210 = vmatprep.subr.mxu0 0.0
    %211 = vmatpush1.msra.mxu0 0.0
    %212 = vmatprep.subr.mxu0 0.0
    %213 = vmatpush1.msra.mxu0 0.0
    %214 = vmatprep.subr.mxu0 0.0
    %215 = vmatpush1.msra.mxu0 0.0
    %216 = vmatprep.subr.mxu0 0.0
    %217 = vmatpush1.msra.mxu0 0.0
    %218 = vmatprep.subr.mxu0 0.0
    %219 = vmatpush1.msra.mxu0 0.0
    %220 = vmatprep.subr.mxu0 0.0
    %221 = vmatpush1.msra.mxu0 0.0
    %222 = vmatprep.subr.mxu0 0.0
    %223 = vmatpush1.msra.mxu0 0.0
    %224 = vmatprep.subr.mxu0 0.0
    %225 = vmatpush1.msra.mxu0 0.0
    %226 = vmatprep.subr.mxu0 0.0
    %227 = vmatpush1.msra.mxu0 0.0
    %228 = vmatprep.subr.mxu0 0.0
    %229 = vmatpush1.msra.mxu0 0.0
    %230 = vmatprep.subr.mxu0 0.0
    %231 = vmatpush1.msra.mxu0 0.0
    %232 = vmatprep.subr.mxu0 0.0
    %233 = vmatpush1.msra.mxu0 0.0
    %234 = vmatprep.subr.mxu0 0.0
    %235 = vmatpush1.msra.mxu0 0.0
    %236 = vmatprep.subr.mxu0 0.0
    %237 = vmatpush1.msra.mxu0 0.0
    %238 = vmatprep.subr.mxu0 0.0
    %239 = vmatpush1.msra.mxu0 0.0
    %240 = vmatprep.subr.mxu0 0.0
    %241 = vmatpush1.msra.mxu0 0.0
    %242 = vmatprep.subr.mxu0 0.0
    %243 = vmatpush1.msra.mxu0 0.0
    %244 = vmatprep.subr.mxu0 0.0
    %245 = vmatpush1.msra.mxu0 0.0
    %246 = vmatprep.subr.mxu0 0.0
    %247 = vmatpush1.msra.mxu0 0.0
    %248 = vmatprep.subr.mxu0 0.0
    %249 = vmatpush1.msra.mxu0 0.0
    %250 = vmatprep.subr.mxu0 0.0
    %251 = vmatpush1.msra.mxu0 0.0
    %252 = vmatprep.subr.mxu0 0.0
    %253 = vmatpush1.msra.mxu0 0.0
    %254 = vmatprep.subr.mxu0 0.0
    %255 = vmatpush1.msra.mxu0 0.0
    %256 = vmatprep.subr.mxu0 0.0
    %257 = vmatpush1.msra.mxu0 0.0
    %258 = vmatprep.mubr.f32.mxu0 0.0
    %259 = vmatmul.mubr.f32.gmra.mrb[0].mxu0 %v192
    %v260 = vpop.f32.mrb[0].mxu0
    %v261 = vadd.f32 %v189, %v260
    %v262 = vpop.f32.mrb[0].mxu0
    %263 = vdwg.mxu0
    %v264 = vmax.f32 %v261, 0.0
    %v265 = vld [vmem:[#allocation8] sm:$0xff]
    %v266 = vld [vmem:[#allocation8 + $0x8] sm:$0xff]
    %v267 = vld [vmem:[#allocation8 + $0x10] sm:$0xff]
    %v268 = vld [vmem:[#allocation8 + $0x18] sm:$0xff]
    %269 = vset.pattern.permute.xlu0 16
    %270 = vperm.xlu0 %269, %v90
    %v271 = vpop.permute.xlu0 %270
    %v273 = vlaneseq
    %v274 = vshrl.u32 %v273, 7
    %v275 = vsub.s32 0, %v274
    %v276 = vrot.slane %v95, %v275
    %v277 = vmul.f32 %v271, %v276
    %v279 = vsel %vm190, %v264, 0
    %281 = vmatprep.subr.mxu0 0.0
    %282 = vmatpush1.msra.mxu0 %v265
    %283 = vmatprep.subr.mxu0 0.0
    %284 = vmatpush1.msra.mxu0 %v266
    %285 = vmatprep.subr.mxu0 0.0
    %286 = vmatpush1.msra.mxu0 %v267
    %287 = vmatprep.subr.mxu0 0.0
    %288 = vmatpush1.msra.mxu0 %v268
    %289 = vmatprep.subr.mxu0 0.0
    %290 = vmatpush1.msra.mxu0 0.0
    %291 = vmatprep.subr.mxu0 0.0
    %292 = vmatpush1.msra.mxu0 0.0
    %293 = vmatprep.subr.mxu0 0.0
    %294 = vmatpush1.msra.mxu0 0.0
    %295 = vmatprep.subr.mxu0 0.0
    %296 = vmatpush1.msra.mxu0 0.0
    %297 = vmatprep.subr.mxu0 0.0
    %298 = vmatpush1.msra.mxu0 0.0
    %299 = vmatprep.subr.mxu0 0.0
    %300 = vmatpush1.msra.mxu0 0.0
    %301 = vmatprep.subr.mxu0 0.0
    %302 = vmatpush1.msra.mxu0 0.0
    %303 = vmatprep.subr.mxu0 0.0
    %304 = vmatpush1.msra.mxu0 0.0
    %305 = vmatprep.subr.mxu0 0.0
    %306 = vmatpush1.msra.mxu0 0.0
    %307 = vmatprep.subr.mxu0 0.0
    %308 = vmatpush1.msra.mxu0 0.0
    %309 = vmatprep.subr.mxu0 0.0
    %310 = vmatpush1.msra.mxu0 0.0
    %311 = vmatprep.subr.mxu0 0.0
    %312 = vmatpush1.msra.mxu0 0.0
    %313 = vmatprep.subr.mxu0 0.0
    %314 = vmatpush1.msra.mxu0 0.0
    %315 = vmatprep.subr.mxu0 0.0
    %316 = vmatpush1.msra.mxu0 0.0
    %317 = vmatprep.subr.mxu0 0.0
    %318 = vmatpush1.msra.mxu0 0.0
    %319 = vmatprep.subr.mxu0 0.0
    %320 = vmatpush1.msra.mxu0 0.0
    %321 = vmatprep.subr.mxu0 0.0
    %322 = vmatpush1.msra.mxu0 0.0
    %323 = vmatprep.subr.mxu0 0.0
    %324 = vmatpush1.msra.mxu0 0.0
    %325 = vmatprep.subr.mxu0 0.0
    %326 = vmatpush1.msra.mxu0 0.0
    %327 = vmatprep.subr.mxu0 0.0
    %328 = vmatpush1.msra.mxu0 0.0
    %329 = vmatprep.subr.mxu0 0.0
    %330 = vmatpush1.msra.mxu0 0.0
    %331 = vmatprep.subr.mxu0 0.0
    %332 = vmatpush1.msra.mxu0 0.0
    %333 = vmatprep.subr.mxu0 0.0
    %334 = vmatpush1.msra.mxu0 0.0
    %335 = vmatprep.subr.mxu0 0.0
    %336 = vmatpush1.msra.mxu0 0.0
    %337 = vmatprep.subr.mxu0 0.0
    %338 = vmatpush1.msra.mxu0 0.0
    %339 = vmatprep.subr.mxu0 0.0
    %340 = vmatpush1.msra.mxu0 0.0
    %341 = vmatprep.subr.mxu0 0.0
    %342 = vmatpush1.msra.mxu0 0.0
    %343 = vmatprep.subr.mxu0 0.0
    %344 = vmatpush1.msra.mxu0 0.0
    %345 = vmatprep.mubr.f32.mxu0 0.0
    %346 = vmatmul.mubr.f32.gmra.mrb[0].mxu0 %v279
    %v347 = vpop.f32.mrb[0].mxu0
    %v348 = vadd.f32 %v277, %v347
    %v349 = vpop.f32.mrb[0].mxu0
    %350 = vdwg.mxu0
    %v351 = vlaneseq
    %v352 = vshrl.u32 %v351, 7
    %v353 = vsub.s32 0, %v352
    %v354 = vrot.slane %v93, %v353
    %v355 = vadd.f32 %v348, %v354
    %v356 = vmax.f32 %v355, 0.0
    %v357 = vld [vmem:[#allocation10] sm:$0xff]
    %v358 = vld [vmem:[#allocation10 + $0x8] sm:$0xff]
    %v359 = vld [vmem:[#allocation10 + $0x10] sm:$0xff]
    %v360 = vld [vmem:[#allocation10 + $0x18] sm:$0xff]
    %v361 = vlaneseq
    %v362 = vshrl.u32 %v361, 7
    %v363 = vsub.s32 0, %v362
    %v364 = vrot.slane %v94, %v363
    %v366 = vsel %vm190, %v356, 0
    %368 = vmatprep.subr.mxu0 0.0
    %369 = vmatpush1.msra.mxu0 %v357
    %370 = vmatprep.subr.mxu0 0.0
    %371 = vmatpush1.msra.mxu0 %v358
    %372 = vmatprep.subr.mxu0 0.0
    %373 = vmatpush1.msra.mxu0 %v359
    %374 = vmatprep.subr.mxu0 0.0
    %375 = vmatpush1.msra.mxu0 %v360
    %376 = vmatprep.subr.mxu0 0.0
    %377 = vmatpush1.msra.mxu0 0.0
    %378 = vmatprep.subr.mxu0 0.0
    %379 = vmatpush1.msra.mxu0 0.0
    %380 = vmatprep.subr.mxu0 0.0
    %381 = vmatpush1.msra.mxu0 0.0
    %382 = vmatprep.subr.mxu0 0.0
    %383 = vmatpush1.msra.mxu0 0.0
    %384 = vmatprep.subr.mxu0 0.0
    %385 = vmatpush1.msra.mxu0 0.0
    %386 = vmatprep.subr.mxu0 0.0
    %387 = vmatpush1.msra.mxu0 0.0
    %388 = vmatprep.subr.mxu0 0.0
    %389 = vmatpush1.msra.mxu0 0.0
    %390 = vmatprep.subr.mxu0 0.0
    %391 = vmatpush1.msra.mxu0 0.0
    %392 = vmatprep.subr.mxu0 0.0
    %393 = vmatpush1.msra.mxu0 0.0
    %394 = vmatprep.subr.mxu0 0.0
    %395 = vmatpush1.msra.mxu0 0.0
    %396 = vmatprep.subr.mxu0 0.0
    %397 = vmatpush1.msra.mxu0 0.0
    %398 = vmatprep.subr.mxu0 0.0
    %399 = vmatpush1.msra.mxu0 0.0
    %400 = vmatprep.subr.mxu0 0.0
    %401 = vmatpush1.msra.mxu0 0.0
    %402 = vmatprep.subr.mxu0 0.0
    %403 = vmatpush1.msra.mxu0 0.0
    %404 = vmatprep.subr.mxu0 0.0
    %405 = vmatpush1.msra.mxu0 0.0
    %406 = vmatprep.subr.mxu0 0.0
    %407 = vmatpush1.msra.mxu0 0.0
    %408 = vmatprep.subr.mxu0 0.0
    %409 = vmatpush1.msra.mxu0 0.0
    %410 = vmatprep.subr.mxu0 0.0
    %411 = vmatpush1.msra.mxu0 0.0
    %412 = vmatprep.subr.mxu0 0.0
    %413 = vmatpush1.msra.mxu0 0.0
    %414 = vmatprep.subr.mxu0 0.0
    %415 = vmatpush1.msra.mxu0 0.0
    %416 = vmatprep.subr.mxu0 0.0
    %417 = vmatpush1.msra.mxu0 0.0
    %418 = vmatprep.subr.mxu0 0.0
    %419 = vmatpush1.msra.mxu0 0.0
    %420 = vmatprep.subr.mxu0 0.0
    %421 = vmatpush1.msra.mxu0 0.0
    %422 = vmatprep.subr.mxu0 0.0
    %423 = vmatpush1.msra.mxu0 0.0
    %424 = vmatprep.subr.mxu0 0.0
    %425 = vmatpush1.msra.mxu0 0.0
    %426 = vmatprep.subr.mxu0 0.0
    %427 = vmatpush1.msra.mxu0 0.0
    %428 = vmatprep.subr.mxu0 0.0
    %429 = vmatpush1.msra.mxu0 0.0
    %430 = vmatprep.subr.mxu0 0.0
    %431 = vmatpush1.msra.mxu0 0.0
    %432 = vmatprep.mubr.f32.mxu0 0.0
    %433 = vmatmul.mubr.f32.gmra.mrb[0].mxu0 %v366
    %v434 = vpop.f32.mrb[0].mxu0
    %v435 = vadd.f32 %v364, %v434
    %v436 = vpop.f32.mrb[0].mxu0
    %437 = vdwg.mxu0
    %438 = vmax.xlane.f32.xlu0 %v435
    %v439 = vpop.xlane.xlu0 %438
    %v440 = vsub.f32 %v435, %v439
    %v441 = vmul.f32 %v440, 1.442695
    %v442 = vpow.pop %v441
    %443 = vadd.xlane.f32.xlu0 %v442
    %v444 = vpop.xlane.xlu0 %443
    %v445 = vmul.f32 %v444, 1.00005
    %v446 = vrcp.pop %v445
    %v447 = vmul.f32 %v445, %v446
    %v448 = vsub.f32 2.0, %v447
    %v449 = vmul.f32 %v446, %v448
    %v450 = vmul.f32 %v444, 1e-05
    %v451 = vadd.f32 %v442, %v450
    %v452 = vmul.f32 %v451, %v449
    %453 = vst [vmem:[#allocation11] sm:$0xff] %v452
    // Predicated region
    $region46: #{tpu_custom_call.1} parent=1 // pred_check
      _
    $region47: #{tpu_custom_call.1} parent=1 // pred_check_branch
      %455 = sbr.rel (0) target = $region49
    $region48: #{tpu_custom_call.1} parent=1 // pred_region
      %s457 = ssub.s32 128, 128
      %458 = vsyncadd [#allocation4], %s457
      %s460 = sshll.u32 [#allocation11], 4
      %s461 = int_to_ptr.vmem [resolvable:$true] %s460
      %463 = dma.vmem_to_hbm [thread:$0]  %s461, 128, %s6, [#allocation4]
    $region49: #{tpu_custom_call.1} parent=1 // pred_fallthru
      _
    // Predicated region
    $region50: #{tpu_custom_call.1} parent=1 // pred_check
      _
    $region51: #{tpu_custom_call.1} parent=1 // pred_check_branch
      %465 = sbr.rel (0) target = $region53
    $region52: #{tpu_custom_call.1} parent=1 // pred_region
      %466 = dma.done [#allocation4], 128
    $region53: #{tpu_custom_call.1} parent=1 // pred_fallthru
      _
    %467 = vsyncpa [#allocation3], 1
    %468 = vsyncpa [#allocation6], 1
    %469 = vsyncpa [#allocation9], 1
    %470 = vsyncpa [#allocation4], 1

</llo_original>
